<compile_context>
chip_gen: v6e
topology: v6e:2x2x1
jax: 0.10.0
libtpu: 0.0.40
codegen_flags: <defaults>
</compile_context>

<pallas_src>
import jax
import jax.numpy as jnp
from jax.experimental import pallas as pl
from jax.experimental.pallas import tpu as pltpu


def _round_up(x, m):
    return ((x + m - 1) // m) * m


def _make_envelope_kernel(n_rc):
    """Kernel over one (1, TN) lane-tile; channels handled by a static loop."""

    def kernel(w_sum_ref, rinv_ref, cinv_ref, t_amb_ref, t_zone_ref, *rest):
        tmid_refs = rest[:n_rc]
        solar_refs = rest[n_rc:2 * n_rc]
        dT_refs = rest[2 * n_rc:3 * n_rc]
        qenv_ref = rest[3 * n_rc]

        t_amb = t_amb_ref[...]            # (1, TN)
        t_zone = t_zone_ref[...]          # (1, TN)
        q_rc = jnp.zeros_like(t_amb)      # running sublane-free accumulator

        for j in range(n_rc):             # static loop: O(1) live vregs in n_rc
            r = rinv_ref[j]               # SMEM f32 scalar (grid-resident)
            c = cinv_ref[j]
            tmid = tmid_refs[j][...]
            q_in = (t_amb - tmid) * r
            q_out = (tmid - t_zone) * r
            dT_refs[j][...] = (q_in - q_out + solar_refs[j][...]) * c
            q_rc = q_rc + q_out

        qenv_ref[...] = q_rc + (t_amb - t_zone) * w_sum_ref[0]

    return kernel


def envelope_rc_forward(T_amb, Tmid_list, Tzone, solar_gains_wall, solar_gains_roof,
                        rc_R_inv, rc_C_inv, window_R_inv, envelop, *,
                        max_tile=32768):
    """Pallas EnvelopeRC forward.

    T_amb/Tzone: (B, T, 1); Tmid_list / solar_*: lists of (B, T, 1).
    Returns (tuple of n_rc (B, T, 1) derivatives, q_env_total (B, T, 1)).
    """
    B, T, _ = T_amb.shape
    n_rc = len(Tmid_list)
    assert n_rc >= 1, "EnvelopeRC requires at least one RC branch"
    N = B * T

    # --- per-channel lane-dense (1, N) views (free reshapes, no packing copy) ---
    def as_row(a):
        return a.astype(jnp.float32).reshape(1, N)

    t_amb = as_row(T_amb)
    t_zone = as_row(Tzone)
    tmid_rows = [as_row(t) for t in Tmid_list]
    solar_list = list(solar_gains_wall) + list(solar_gains_roof)
    if len(solar_list) == n_rc:
        solar_rows = [as_row(s) for s in solar_list]
    else:  # matches the module's `torch.zeros_like(Tmid_stacked)` fallback
        solar_rows = [jnp.zeros((1, N), jnp.float32)] * n_rc

    # --- bounded parameters: stable softplus computed once, SMEM-resident ---
    r_inv = (jax.nn.softplus(rc_R_inv) * (1.0 / envelop['r_opaque_coef'])
             ).astype(jnp.float32).reshape(n_rc)
    c_inv = (jax.nn.softplus(rc_C_inv) * (1.0 / envelop['c_opaque_coef'])
             ).astype(jnp.float32).reshape(n_rc)
    if window_R_inv is not None and window_R_inv.shape[0] > 0:
        # (T_amb - Tzone) is identical for every window -> fold the sum of the
        # bounded window conductances into a single scalar.
        w_sum = (jnp.sum(jax.nn.softplus(window_R_inv))
                 * (1.0 / envelop['r_transparent_coef']))
    else:
        w_sum = jnp.float32(0.0)
    w_sum = jnp.reshape(w_sum, (1,)).astype(jnp.float32)

    # --- lane-tile selection ----------------------------------------------
    # Per-channel (1, TN) VMEM buffers pad to 8 sublanes; account for that and
    # for double-buffering when deriving TN from a VMEM budget that is safe on
    # v7x's 64 MiB physical VMEM (and trivially safe on v5e/v6e's 128 MiB).
    n_streams = (2 + 2 * n_rc) + (n_rc + 1)          # tiled inputs + outputs
    per_lane_col = n_streams * 2 * 8 * 4              # double-buffered, 8-sublane, f32
    vmem_budget = 40 * 1024 * 1024
    tn_vmem = max(128, (vmem_budget // per_lane_col) // 128 * 128)
    half_n = _round_up(pl.cdiv(N, 2), 128)            # keep >= 2 blocks for v7x 2-TC
    TN = max(128, min(max_tile, tn_vmem, half_n))
    grid_n = pl.cdiv(N, TN)                           # no padding: Pallas masks last block
    vmem_limit = int(min(48 * 1024 * 1024,
                         max(32 * 1024 * 1024, per_lane_col * TN + (4 << 20))))

    row_spec = pl.BlockSpec((1, TN), lambda i: (0, i))
    smem_spec = pl.BlockSpec(memory_space=pltpu.MemorySpace.SMEM)

    in_specs = ([smem_spec, smem_spec, smem_spec,      # w_sum, r_inv, c_inv
                 row_spec, row_spec]                   # T_amb, Tzone
                + [row_spec] * (2 * n_rc))             # Tmid_i..., solar_i...
    out_specs = tuple([row_spec] * (n_rc + 1))
    out_shape = tuple([jax.ShapeDtypeStruct((1, N), jnp.float32)] * (n_rc + 1))

    outs = pl.pallas_call(
        _make_envelope_kernel(n_rc),
        out_shape=out_shape,
        grid=(grid_n,),
        in_specs=in_specs,
        out_specs=out_specs,
        compiler_params=pltpu.CompilerParams(
            dimension_semantics=("parallel",),          # megacore / v7x 2-TC sharding
            vmem_limit_bytes=vmem_limit),
    )(w_sum, r_inv, c_inv, t_amb, t_zone, *tmid_rows, *solar_rows)

    # Metadata-only reshapes back to (B, T, 1): no HBM copies.
    dTmid_dt_list = tuple(outs[i].reshape(B, T, 1) for i in range(n_rc))
    q_env_total = outs[n_rc].reshape(B, T, 1)
    return dTmid_dt_list, q_env_total


def _reference(T_amb, Tmid_list, Tzone, sg_wall, sg_roof,
               rc_R_inv, rc_C_inv, window_R_inv, envelop):
    n_rc = len(Tmid_list)
    Tmid = jnp.concatenate(Tmid_list, axis=2)
    r_inv = jax.nn.softplus(rc_R_inv) * (1.0 / envelop['r_opaque_coef'])
    c_inv = jax.nn.softplus(rc_C_inv) * (1.0 / envelop['c_opaque_coef'])
    q_in = (T_amb - Tmid) * r_inv
    q_out = (Tmid - Tzone) * r_inv
    solar = jnp.concatenate(list(sg_wall) + list(sg_roof), axis=2)
    dT = (q_in - q_out + solar) * c_inv
    q_window_total = 0.0
    if window_R_inv is not None and window_R_inv.shape[0] > 0:
        w_inv = jax.nn.softplus(window_R_inv) * (1.0 / envelop['r_transparent_coef'])
        q_window = (T_amb - Tzone) * w_inv
        q_window_total = jnp.sum(q_window, axis=2, keepdims=True)
    q_env = jnp.sum(q_out, axis=2, keepdims=True) + q_window_total
    dT_list = tuple(dT[:, :, i:i + 1] for i in range(n_rc))
    return dT_list, q_env


if __name__ == "__main__":
    B, T = 2, 8
    n_wall, n_roof, n_window = 2, 1, 2
    n_rc = n_wall + n_roof
    envelop = {'r_opaque_coef': 10.0, 'c_opaque_coef': 1000.0,
               'r_transparent_coef': 2.0}

    # Deterministic parameter init matching the module's __init__
    wall_r = jnp.array([1.0 / (10.0 + i * 1.0) for i in range(n_wall)], jnp.float32)
    roof_r = jnp.array([1.0 / (20.0 + i * 2.0) for i in range(n_roof)], jnp.float32)
    rc_R_inv = jnp.concatenate([wall_r, roof_r])
    wall_c = jnp.array([1.0 / (80.0 + i * 10.0) for i in range(n_wall)], jnp.float32)
    roof_c = jnp.array([1.0 / (60.0 + i * 10.0) for i in range(n_roof)], jnp.float32)
    rc_C_inv = jnp.concatenate([wall_c, roof_c])
    window_R_inv = jnp.array([1.0 / (1.0 + i * 0.1) for i in range(n_window)],
                             jnp.float32)

    key = jax.random.PRNGKey(0)
    ks = jax.random.split(key, 2 + 2 * n_rc)
    T_amb = 25.0 + 5.0 * jax.random.normal(ks[0], (B, T, 1), jnp.float32)
    Tzone = 22.0 + 1.0 * jax.random.normal(ks[1], (B, T, 1), jnp.float32)
    Tmid_list = [20.0 + 3.0 * jax.random.normal(ks[2 + i], (B, T, 1), jnp.float32)
                 for i in range(n_rc)]
    sg_keys = ks[2 + n_rc:]
    solar_gains_wall = [10.0 * jax.random.uniform(sg_keys[i], (B, T, 1), jnp.float32)
                        for i in range(n_wall)]
    solar_gains_roof = [15.0 * jax.random.uniform(sg_keys[n_wall + i], (B, T, 1),
                                                  jnp.float32)
                        for i in range(n_roof)]

    dT_list, q_env = envelope_rc_forward(
        T_amb, Tmid_list, Tzone, solar_gains_wall, solar_gains_roof,
        rc_R_inv, rc_C_inv, window_R_inv, envelop)
    q_env = jax.block_until_ready(q_env)
    dT_list = [jax.block_until_ready(d) for d in dT_list]

    ref_dT, ref_qenv = _reference(T_amb, Tmid_list, Tzone, solar_gains_wall,
                                  solar_gains_roof, rc_R_inv, rc_C_inv,
                                  window_R_inv, envelop)

    assert q_env.shape == (B, T, 1)
    assert len(dT_list) == n_rc and all(d.shape == (B, T, 1) for d in dT_list)
    for got, want in zip(dT_list, ref_dT):
        assert jnp.allclose(got, want, atol=1e-5, rtol=1e-5), (
            f"dTmid_dt max err {jnp.max(jnp.abs(got - want))}")
    assert jnp.allclose(q_env, ref_qenv, atol=1e-5, rtol=1e-5), (
        f"q_env max err {jnp.max(jnp.abs(q_env - ref_qenv))}")

    print("KERNEL_OK")
</pallas_src>

<mosaic_0001>
module attributes {stable_mosaic.version = 11 : i64} {
  func.func @kernel(%arg0: i32, %arg1: memref<1xf32, #tpu.memory_space<smem>>, %arg2: memref<3xf32, #tpu.memory_space<smem>>, %arg3: memref<3xf32, #tpu.memory_space<smem>>, %arg4: memref<1x128xf32, #tpu.memory_space<vmem>>, %arg5: memref<1x128xf32, #tpu.memory_space<vmem>>, %arg6: memref<1x128xf32, #tpu.memory_space<vmem>>, %arg7: memref<1x128xf32, #tpu.memory_space<vmem>>, %arg8: memref<1x128xf32, #tpu.memory_space<vmem>>, %arg9: memref<1x128xf32, #tpu.memory_space<vmem>>, %arg10: memref<1x128xf32, #tpu.memory_space<vmem>>, %arg11: memref<1x128xf32, #tpu.memory_space<vmem>>, %arg12: memref<1x128xf32, #tpu.memory_space<vmem>>, %arg13: memref<1x128xf32, #tpu.memory_space<vmem>>, %arg14: memref<1x128xf32, #tpu.memory_space<vmem>>, %arg15: memref<1x128xf32, #tpu.memory_space<vmem>>) attributes {dimension_semantics = [#tpu.dimension_semantics<parallel>], iteration_bounds = array<i64: 1>, scalar_prefetch = 0 : i64, scratch_operands = 0 : i64, tpu.core_type = #tpu.core_type<tc>, window_params = [{transform_indices = @transform_0, window_bounds = array<i64: 1>}, {transform_indices = @transform_1, window_bounds = array<i64: 3>}, {transform_indices = @transform_2, window_bounds = array<i64: 3>}, {transform_indices = @transform_3, window_bounds = array<i64: 1, 128>}, {transform_indices = @transform_4, window_bounds = array<i64: 1, 128>}, {transform_indices = @transform_5, window_bounds = array<i64: 1, 128>}, {transform_indices = @transform_6, window_bounds = array<i64: 1, 128>}, {transform_indices = @transform_7, window_bounds = array<i64: 1, 128>}, {transform_indices = @transform_8, window_bounds = array<i64: 1, 128>}, {transform_indices = @transform_9, window_bounds = array<i64: 1, 128>}, {transform_indices = @transform_10, window_bounds = array<i64: 1, 128>}, {transform_indices = @transform_11, window_bounds = array<i64: 1, 128>}, {transform_indices = @transform_12, window_bounds = array<i64: 1, 128>}, {transform_indices = @transform_13, window_bounds = array<i64: 1, 128>}, {transform_indices = @transform_14, window_bounds = array<i64: 1, 128>}]} {
    %c0 = arith.constant 0 : index
    %c0_0 = arith.constant 0 : index
    %0 = vector.load %arg4[%c0, %c0_0] : memref<1x128xf32, #tpu.memory_space<vmem>>, vector<1x128xf32>
    %c0_1 = arith.constant 0 : index
    %c0_2 = arith.constant 0 : index
    %1 = vector.load %arg5[%c0_1, %c0_2] : memref<1x128xf32, #tpu.memory_space<vmem>>, vector<1x128xf32>
    %cst = arith.constant 0.000000e+00 : f32
    %2 = vector.broadcast %cst : f32 to vector<1x128xf32>
    %c0_3 = arith.constant 0 : index
    %3 = memref.load %arg2[%c0_3] : memref<3xf32, #tpu.memory_space<smem>>
    %c0_4 = arith.constant 0 : index
    %4 = memref.load %arg3[%c0_4] : memref<3xf32, #tpu.memory_space<smem>>
    %c0_5 = arith.constant 0 : index
    %c0_6 = arith.constant 0 : index
    %5 = vector.load %arg6[%c0_5, %c0_6] : memref<1x128xf32, #tpu.memory_space<vmem>>, vector<1x128xf32>
    %6 = arith.subf %0, %5 : vector<1x128xf32>
    %7 = vector.broadcast %3 : f32 to vector<1x128xf32>
    %8 = arith.mulf %6, %7 : vector<1x128xf32>
    %9 = arith.subf %5, %1 : vector<1x128xf32>
    %10 = vector.broadcast %3 : f32 to vector<1x128xf32>
    %11 = arith.mulf %9, %10 : vector<1x128xf32>
    %12 = arith.subf %8, %11 : vector<1x128xf32>
    %c0_7 = arith.constant 0 : index
    %c0_8 = arith.constant 0 : index
    %13 = vector.load %arg9[%c0_7, %c0_8] : memref<1x128xf32, #tpu.memory_space<vmem>>, vector<1x128xf32>
    %14 = arith.addf %12, %13 : vector<1x128xf32>
    %15 = vector.broadcast %4 : f32 to vector<1x128xf32>
    %16 = arith.mulf %14, %15 : vector<1x128xf32>
    %c0_9 = arith.constant 0 : index
    %c0_10 = arith.constant 0 : index
    %17 = vector.load %arg12[%c0_9, %c0_10] : memref<1x128xf32, #tpu.memory_space<vmem>>, vector<1x128xf32>
    tpu.vector_store %arg12[%c0_9, %c0_10], %16 {strides = array<i32>} : memref<1x128xf32, #tpu.memory_space<vmem>>, vector<1x128xf32>,
    %18 = arith.addf %2, %11 : vector<1x128xf32>
    %c1 = arith.constant 1 : index
    %19 = memref.load %arg2[%c1] : memref<3xf32, #tpu.memory_space<smem>>
    %c1_11 = arith.constant 1 : index
    %20 = memref.load %arg3[%c1_11] : memref<3xf32, #tpu.memory_space<smem>>
    %c0_12 = arith.constant 0 : index
    %c0_13 = arith.constant 0 : index
    %21 = vector.load %arg7[%c0_12, %c0_13] : memref<1x128xf32, #tpu.memory_space<vmem>>, vector<1x128xf32>
    %22 = arith.subf %0, %21 : vector<1x128xf32>
    %23 = vector.broadcast %19 : f32 to vector<1x128xf32>
    %24 = arith.mulf %22, %23 : vector<1x128xf32>
    %25 = arith.subf %21, %1 : vector<1x128xf32>
    %26 = vector.broadcast %19 : f32 to vector<1x128xf32>
    %27 = arith.mulf %25, %26 : vector<1x128xf32>
    %28 = arith.subf %24, %27 : vector<1x128xf32>
    %c0_14 = arith.constant 0 : index
    %c0_15 = arith.constant 0 : index
    %29 = vector.load %arg10[%c0_14, %c0_15] : memref<1x128xf32, #tpu.memory_space<vmem>>, vector<1x128xf32>
    %30 = arith.addf %28, %29 : vector<1x128xf32>
    %31 = vector.broadcast %20 : f32 to vector<1x128xf32>
    %32 = arith.mulf %30, %31 : vector<1x128xf32>
    %c0_16 = arith.constant 0 : index
    %c0_17 = arith.constant 0 : index
    %33 = vector.load %arg13[%c0_16, %c0_17] : memref<1x128xf32, #tpu.memory_space<vmem>>, vector<1x128xf32>
    tpu.vector_store %arg13[%c0_16, %c0_17], %32 {strides = array<i32>} : memref<1x128xf32, #tpu.memory_space<vmem>>, vector<1x128xf32>,
    %34 = arith.addf %18, %27 : vector<1x128xf32>
    %c2 = arith.constant 2 : index
    %35 = memref.load %arg2[%c2] : memref<3xf32, #tpu.memory_space<smem>>
    %c2_18 = arith.constant 2 : index
    %36 = memref.load %arg3[%c2_18] : memref<3xf32, #tpu.memory_space<smem>>
    %c0_19 = arith.constant 0 : index
    %c0_20 = arith.constant 0 : index
    %37 = vector.load %arg8[%c0_19, %c0_20] : memref<1x128xf32, #tpu.memory_space<vmem>>, vector<1x128xf32>
    %38 = arith.subf %0, %37 : vector<1x128xf32>
    %39 = vector.broadcast %35 : f32 to vector<1x128xf32>
    %40 = arith.mulf %38, %39 : vector<1x128xf32>
    %41 = arith.subf %37, %1 : vector<1x128xf32>
    %42 = vector.broadcast %35 : f32 to vector<1x128xf32>
    %43 = arith.mulf %41, %42 : vector<1x128xf32>
    %44 = arith.subf %40, %43 : vector<1x128xf32>
    %c0_21 = arith.constant 0 : index
    %c0_22 = arith.constant 0 : index
    %45 = vector.load %arg11[%c0_21, %c0_22] : memref<1x128xf32, #tpu.memory_space<vmem>>, vector<1x128xf32>
    %46 = arith.addf %44, %45 : vector<1x128xf32>
    %47 = vector.broadcast %36 : f32 to vector<1x128xf32>
    %48 = arith.mulf %46, %47 : vector<1x128xf32>
    %c0_23 = arith.constant 0 : index
    %c0_24 = arith.constant 0 : index
    %49 = vector.load %arg14[%c0_23, %c0_24] : memref<1x128xf32, #tpu.memory_space<vmem>>, vector<1x128xf32>
    tpu.vector_store %arg14[%c0_23, %c0_24], %48 {strides = array<i32>} : memref<1x128xf32, #tpu.memory_space<vmem>>, vector<1x128xf32>,
    %50 = arith.addf %34, %43 : vector<1x128xf32>
    %51 = arith.subf %0, %1 : vector<1x128xf32>
    %c0_25 = arith.constant 0 : index
    %52 = memref.load %arg1[%c0_25] : memref<1xf32, #tpu.memory_space<smem>>
    %53 = vector.broadcast %52 : f32 to vector<1x128xf32>
    %54 = arith.mulf %51, %53 : vector<1x128xf32>
    %55 = arith.addf %50, %54 : vector<1x128xf32>
    %c0_26 = arith.constant 0 : index
    %c0_27 = arith.constant 0 : index
    %56 = vector.load %arg15[%c0_26, %c0_27] : memref<1x128xf32, #tpu.memory_space<vmem>>, vector<1x128xf32>
    tpu.vector_store %arg15[%c0_26, %c0_27], %55 {strides = array<i32>} : memref<1x128xf32, #tpu.memory_space<vmem>>, vector<1x128xf32>,
    return
  }
  func.func @transform_0(%arg0: i32) -> i32 {
    %c0_i32 = arith.constant 0 : i32
    %c0_i32_0 = arith.constant 0 : i32
    return %c0_i32 : i32
  }
  func.func @transform_1(%arg0: i32) -> i32 {
    %c0_i32 = arith.constant 0 : i32
    %c0_i32_0 = arith.constant 0 : i32
    return %c0_i32 : i32
  }
  func.func @transform_2(%arg0: i32) -> i32 {
    %c0_i32 = arith.constant 0 : i32
    %c0_i32_0 = arith.constant 0 : i32
    return %c0_i32 : i32
  }
  func.func @transform_3(%arg0: i32) -> (i32, i32) {
    %c0_i32 = arith.constant 0 : i32
    %c0_i32_0 = arith.constant 0 : i32
    return %c0_i32, %arg0 : i32, i32
  }
  func.func @transform_4(%arg0: i32) -> (i32, i32) {
    %c0_i32 = arith.constant 0 : i32
    %c0_i32_0 = arith.constant 0 : i32
    return %c0_i32, %arg0 : i32, i32
  }
  func.func @transform_5(%arg0: i32) -> (i32, i32) {
    %c0_i32 = arith.constant 0 : i32
    %c0_i32_0 = arith.constant 0 : i32
    return %c0_i32, %arg0 : i32, i32
  }
  func.func @transform_6(%arg0: i32) -> (i32, i32) {
    %c0_i32 = arith.constant 0 : i32
    %c0_i32_0 = arith.constant 0 : i32
    return %c0_i32, %arg0 : i32, i32
  }
  func.func @transform_7(%arg0: i32) -> (i32, i32) {
    %c0_i32 = arith.constant 0 : i32
    %c0_i32_0 = arith.constant 0 : i32
    return %c0_i32, %arg0 : i32, i32
  }
  func.func @transform_8(%arg0: i32) -> (i32, i32) {
    %c0_i32 = arith.constant 0 : i32
    %c0_i32_0 = arith.constant 0 : i32
    return %c0_i32, %arg0 : i32, i32
  }
  func.func @transform_9(%arg0: i32) -> (i32, i32) {
    %c0_i32 = arith.constant 0 : i32
    %c0_i32_0 = arith.constant 0 : i32
    return %c0_i32, %arg0 : i32, i32
  }
  func.func @transform_10(%arg0: i32) -> (i32, i32) {
    %c0_i32 = arith.constant 0 : i32
    %c0_i32_0 = arith.constant 0 : i32
    return %c0_i32, %arg0 : i32, i32
  }
  func.func @transform_11(%arg0: i32) -> (i32, i32) {
    %c0_i32 = arith.constant 0 : i32
    %c0_i32_0 = arith.constant 0 : i32
    return %c0_i32, %arg0 : i32, i32
  }
  func.func @transform_12(%arg0: i32) -> (i32, i32) {
    %c0_i32 = arith.constant 0 : i32
    %c0_i32_0 = arith.constant 0 : i32
    return %c0_i32, %arg0 : i32, i32
  }
  func.func @transform_13(%arg0: i32) -> (i32, i32) {
    %c0_i32 = arith.constant 0 : i32
    %c0_i32_0 = arith.constant 0 : i32
    return %c0_i32, %arg0 : i32, i32
  }
  func.func @transform_14(%arg0: i32) -> (i32, i32) {
    %c0_i32 = arith.constant 0 : i32
    %c0_i32_0 = arith.constant 0 : i32
    return %c0_i32, %arg0 : i32, i32
  }
}

</mosaic_0001>

<llo_original>
// kernel: tpu_custom_call.1
$region0: #{tpu_custom_call.1}
  #allocation0 [shape = 'u32[]', space=smem, size = 0x4, offset = 0x4, fixed_abs, tag = 'smem constant byte address 0x4 - core index']
  #allocation1 [shape = 'u32[144,128]{1,0:T(1,128)}', space=vmem, size = 0x12000, scoped, tag = 'internal scratch']
  #allocation2 [shape = 'f32[1]{0:T(128)S(6)}', space=smem, size = 0x200, scoped, tag = 'scoped memory for tpu_custom_call.1']
  %s0 = inlined_call_operand.<no memory space> [shape: f32[1], index: 0, kind: input, shape index: {}]
  %s1 = inlined_call_operand.vmem [shape: f32[3], index: 1, kind: input, shape index: {}]
  %s2 = inlined_call_operand.vmem [shape: f32[3], index: 2, kind: input, shape index: {}]
  %s3 = inlined_call_operand.vmem [shape: f32[1,16], index: 3, kind: input, shape index: {}]
  %s4 = inlined_call_operand.vmem [shape: f32[1,16], index: 4, kind: input, shape index: {}]
  %s5 = inlined_call_operand.vmem [shape: f32[1,16], index: 5, kind: input, shape index: {}]
  %s6 = inlined_call_operand.vmem [shape: f32[1,16], index: 6, kind: input, shape index: {}]
  %s7 = inlined_call_operand.vmem [shape: f32[1,16], index: 7, kind: input, shape index: {}]
  %s8 = inlined_call_operand.vmem [shape: f32[1,16], index: 8, kind: input, shape index: {}]
  %s9 = inlined_call_operand.vmem [shape: f32[1,16], index: 9, kind: input, shape index: {}]
  %s10 = inlined_call_operand.vmem [shape: f32[1,16], index: 10, kind: input, shape index: {}]
  %s11 = inlined_call_operand.hbm [shape: f32[1,16], index: 11, kind: output, shape index: {0}]
  %s12 = inlined_call_operand.hbm [shape: f32[1,16], index: 12, kind: output, shape index: {1}]
  %s13 = inlined_call_operand.hbm [shape: f32[1,16], index: 13, kind: output, shape index: {2}]
  %s14 = inlined_call_operand.hbm [shape: f32[1,16], index: 14, kind: output, shape index: {3}]
  %15 = xla_tuple %s11, %s12, %s13, %s14
  %s16 = sld [smem:[#allocation0]]
  $region86: #{tpu_custom_call.1} parent=0
    _
  %s18 = ssub.s32 1, %s16
  %s19 = scalar_select 0, %s18, %s16
  %20 = sst [smem:[#allocation2]] %s0
  $region1: #{tpu_custom_call.1} parent=0
    #allocation3 [shape = 'u8[512]{0}', space=smem, size = 0x200, scoped, tag = 'input window, operand 1, single buffered']
    #allocation4 [shape = 's32[1]{0}', space=sflag, size = 0x4, scoped, tag = 'scoped memory for tpu_custom_call.1']
    #allocation5 [shape = 's32[1]{0}', space=sflag, size = 0x4, scoped, tag = 'scoped memory for tpu_custom_call.1']
    #allocation6 [shape = 'u8[512]{0}', space=smem, size = 0x200, scoped, tag = 'input window, operand 2, single buffered']
    #allocation7 [shape = 's32[1]{0}', space=sflag, size = 0x4, scoped, tag = 'scoped memory for tpu_custom_call.1']
    #allocation8 [shape = 'u8[512]{0}', space=vmem, size = 0x400, scoped, tag = 'output window, operand 0, single buffered']
    #allocation9 [shape = 'u8[512]{0}', space=vmem, size = 0x400, scoped, tag = 'output window, operand 1, single buffered']
    #allocation10 [shape = 's32[1]{0}', space=sflag, size = 0x4, scoped, tag = 'scoped memory for tpu_custom_call.1']
    #allocation11 [shape = 'u8[512]{0}', space=vmem, size = 0x400, scoped, tag = 'output window, operand 2, single buffered']
    #allocation12 [shape = 'u8[512]{0}', space=vmem, size = 0x400, scoped, tag = 'output window, operand 3, single buffered']
    #allocation13 [shape = 's32[1]{0}', space=sflag, size = 0x4, scoped, tag = 'scoped memory for tpu_custom_call.1']
    %21 = vsyncpa [#allocation5], 0
    %22 = vsyncpa [#allocation7], 0
    %23 = vsyncpa [#allocation4], 0
    %24 = vsyncpa [#allocation10], 0
    %25 = vsyncpa [#allocation13], 0
    // Predicated region
    $region2: #{tpu_custom_call.1} parent=1 // pred_check
      _
    $region3: #{tpu_custom_call.1} parent=1 // pred_check_branch
      %27 = sbr.rel (0) target = $region5
    $region4: #{tpu_custom_call.1} parent=1 // pred_region
      _
    $region5: #{tpu_custom_call.1} parent=1 // pred_fallthru
      _
    // Predicated region
    $region6: #{tpu_custom_call.1} parent=1 // pred_check
      _
    $region7: #{tpu_custom_call.1} parent=1 // pred_check_branch
      %29 = sbr.rel (0) target = $region9
    $region8: #{tpu_custom_call.1} parent=1 // pred_region
      %s31 = ssub.s32 16, 16
      %32 = vsyncadd [#allocation5], %s31
      %s34 = sshll.u32 %s1, 4
      %s35 = int_to_ptr.vmem [resolvable:$true] %s34
      %37 = dma.vmem_to_smem %s35, 16, [#allocation3], [#allocation5]
    $region9: #{tpu_custom_call.1} parent=1 // pred_fallthru
      _
    // Predicated region
    $region10: #{tpu_custom_call.1} parent=1 // pred_check
      _
    $region11: #{tpu_custom_call.1} parent=1 // pred_check_branch
      %39 = sbr.rel (0) target = $region13
    $region12: #{tpu_custom_call.1} parent=1 // pred_region
      %s41 = ssub.s32 16, 16
      %42 = vsyncadd [#allocation7], %s41
      %s44 = sshll.u32 %s2, 4
      %s45 = int_to_ptr.vmem [resolvable:$true] %s44
      %47 = dma.vmem_to_smem %s45, 16, [#allocation6], [#allocation7]
    $region13: #{tpu_custom_call.1} parent=1 // pred_fallthru
      _
    // Predicated region
    $region14: #{tpu_custom_call.1} parent=1 // pred_check
      _
    $region15: #{tpu_custom_call.1} parent=1 // pred_check_branch
      %49 = sbr.rel (0) target = $region17
    $region16: #{tpu_custom_call.1} parent=1 // pred_region
      _
    $region17: #{tpu_custom_call.1} parent=1 // pred_fallthru
      _
    // Predicated region
    $region18: #{tpu_custom_call.1} parent=1 // pred_check
      _
    $region19: #{tpu_custom_call.1} parent=1 // pred_check_branch
      %51 = sbr.rel (0) target = $region21
    $region20: #{tpu_custom_call.1} parent=1 // pred_region
      _
    $region21: #{tpu_custom_call.1} parent=1 // pred_fallthru
      _
    // Predicated region
    $region22: #{tpu_custom_call.1} parent=1 // pred_check
      _
    $region23: #{tpu_custom_call.1} parent=1 // pred_check_branch
      %53 = sbr.rel (0) target = $region25
    $region24: #{tpu_custom_call.1} parent=1 // pred_region
      _
    $region25: #{tpu_custom_call.1} parent=1 // pred_fallthru
      _
    // Predicated region
    $region26: #{tpu_custom_call.1} parent=1 // pred_check
      _
    $region27: #{tpu_custom_call.1} parent=1 // pred_check_branch
      %55 = sbr.rel (0) target = $region29
    $region28: #{tpu_custom_call.1} parent=1 // pred_region
      _
    $region29: #{tpu_custom_call.1} parent=1 // pred_fallthru
      _
    // Predicated region
    $region30: #{tpu_custom_call.1} parent=1 // pred_check
      _
    $region31: #{tpu_custom_call.1} parent=1 // pred_check_branch
      %57 = sbr.rel (0) target = $region33
    $region32: #{tpu_custom_call.1} parent=1 // pred_region
      _
    $region33: #{tpu_custom_call.1} parent=1 // pred_fallthru
      _
    // Predicated region
    $region34: #{tpu_custom_call.1} parent=1 // pred_check
      _
    $region35: #{tpu_custom_call.1} parent=1 // pred_check_branch
      %59 = sbr.rel (0) target = $region37
    $region36: #{tpu_custom_call.1} parent=1 // pred_region
      _
    $region37: #{tpu_custom_call.1} parent=1 // pred_fallthru
      _
    // Predicated region
    $region38: #{tpu_custom_call.1} parent=1 // pred_check
      _
    $region39: #{tpu_custom_call.1} parent=1 // pred_check_branch
      %61 = sbr.rel (0) target = $region41
    $region40: #{tpu_custom_call.1} parent=1 // pred_region
      _
    $region41: #{tpu_custom_call.1} parent=1 // pred_fallthru
      _
    // Predicated region
    $region42: #{tpu_custom_call.1} parent=1 // pred_check
      _
    $region43: #{tpu_custom_call.1} parent=1 // pred_check_branch
      %63 = sbr.rel (0) target = $region45
    $region44: #{tpu_custom_call.1} parent=1 // pred_region
      _
    $region45: #{tpu_custom_call.1} parent=1 // pred_fallthru
      _
    // Predicated region
    $region46: #{tpu_custom_call.1} parent=1 // pred_check
      _
    $region47: #{tpu_custom_call.1} parent=1 // pred_check_branch
      %65 = sbr.rel (0) target = $region49
    $region48: #{tpu_custom_call.1} parent=1 // pred_region
      %66 = dma.done [#allocation5], 16
    $region49: #{tpu_custom_call.1} parent=1 // pred_fallthru
      _
    // Predicated region
    $region50: #{tpu_custom_call.1} parent=1 // pred_check
      _
    $region51: #{tpu_custom_call.1} parent=1 // pred_check_branch
      %68 = sbr.rel (0) target = $region53
    $region52: #{tpu_custom_call.1} parent=1 // pred_region
      %69 = dma.done [#allocation7], 16
    $region53: #{tpu_custom_call.1} parent=1 // pred_fallthru
      _
    %70 = sfence
    %v71 = vld [vmem:[%s3] sm:$0x1]
    %v72 = vld [vmem:[%s4] sm:$0x1]
    %s73 = sld [smem:[#allocation3]]
    %s74 = sld [smem:[#allocation6]]
    %v75 = vld [vmem:[%s5] sm:$0x1]
    %v76 = vsub.f32 %v71, %v75
    %v77 = vstv %s73
    %v78 = vmul.f32 %v76, %v77
    %v79 = vsub.f32 %v75, %v72
    %v80 = vmul.f32 %v79, %v77
    %v81 = vsub.f32 %v78, %v80
    %v82 = vld [vmem:[%s8] sm:$0x1]
    %v83 = vadd.f32 %v81, %v82
    %v84 = vstv %s74
    %v85 = vmul.f32 %v83, %v84
    %86 = vst [vmem:[#allocation8] sm:$0x1] %v85
    %v87 = vadd.f32 %v80, 0.0
    %s88 = sld [smem:[#allocation3 + $0x1]]
    %s89 = sld [smem:[#allocation6 + $0x1]]
    %v90 = vld [vmem:[%s6] sm:$0x1]
    %v91 = vsub.f32 %v71, %v90
    %v92 = vstv %s88
    %v93 = vmul.f32 %v91, %v92
    %v94 = vsub.f32 %v90, %v72
    %v95 = vmul.f32 %v94, %v92
    %v96 = vsub.f32 %v93, %v95
    %v97 = vld [vmem:[%s9] sm:$0x1]
    %v98 = vadd.f32 %v96, %v97
    %v99 = vstv %s89
    %v100 = vmul.f32 %v98, %v99
    %101 = vst [vmem:[#allocation9] sm:$0x1] %v100
    %v102 = vadd.f32 %v87, %v95
    %s103 = sld [smem:[#allocation3 + $0x2]]
    %s104 = sld [smem:[#allocation6 + $0x2]]
    %v105 = vld [vmem:[%s7] sm:$0x1]
    %v106 = vsub.f32 %v71, %v105
    %v107 = vstv %s103
    %v108 = vmul.f32 %v106, %v107
    %v109 = vsub.f32 %v105, %v72
    %v110 = vmul.f32 %v109, %v107
    %v111 = vsub.f32 %v108, %v110
    %v112 = vld [vmem:[%s10] sm:$0x1]
    %v113 = vadd.f32 %v111, %v112
    %v114 = vstv %s104
    %v115 = vmul.f32 %v113, %v114
    %116 = vst [vmem:[#allocation11] sm:$0x1] %v115
    %v117 = vadd.f32 %v102, %v110
    %v118 = vsub.f32 %v71, %v72
    %s119 = sld [smem:[#allocation2]]
    %v120 = vstv %s119
    %v121 = vmul.f32 %v118, %v120
    %v122 = vadd.f32 %v117, %v121
    %123 = vst [vmem:[#allocation12] sm:$0x1] %v122
    // Predicated region
    $region54: #{tpu_custom_call.1} parent=1 // pred_check
      _
    $region55: #{tpu_custom_call.1} parent=1 // pred_check_branch
      %125 = sbr.rel (0) target = $region57
    $region56: #{tpu_custom_call.1} parent=1 // pred_region
      %s127 = ssub.s32 16, 16
      %128 = vsyncadd [#allocation4], %s127
      %s130 = sshll.u32 [#allocation8], 4
      %s131 = int_to_ptr.vmem [resolvable:$true] %s130
      %133 = dma.vmem_to_hbm [thread:$0]  %s131, 16, %s11, [#allocation4]
    $region57: #{tpu_custom_call.1} parent=1 // pred_fallthru
      _
    // Predicated region
    $region58: #{tpu_custom_call.1} parent=1 // pred_check
      _
    $region59: #{tpu_custom_call.1} parent=1 // pred_check_branch
      %135 = sbr.rel (0) target = $region61
    $region60: #{tpu_custom_call.1} parent=1 // pred_region
      %s137 = ssub.s32 16, 16
      %138 = vsyncadd [#allocation10], %s137
      %s140 = sshll.u32 [#allocation9], 4
      %s141 = int_to_ptr.vmem [resolvable:$true] %s140
      %143 = dma.vmem_to_hbm [thread:$0]  %s141, 16, %s12, [#allocation10]
    $region61: #{tpu_custom_call.1} parent=1 // pred_fallthru
      _
    // Predicated region
    $region62: #{tpu_custom_call.1} parent=1 // pred_check
      _
    $region63: #{tpu_custom_call.1} parent=1 // pred_check_branch
      %145 = sbr.rel (0) target = $region65
    $region64: #{tpu_custom_call.1} parent=1 // pred_region
      %s147 = ssub.s32 16, 16
      %148 = vsyncadd [#allocation10], %s147
      %s150 = sshll.u32 [#allocation11], 4
      %s151 = int_to_ptr.vmem [resolvable:$true] %s150
      %153 = dma.vmem_to_hbm [thread:$0]  %s151, 16, %s13, [#allocation10]
    $region65: #{tpu_custom_call.1} parent=1 // pred_fallthru
      _
    // Predicated region
    $region66: #{tpu_custom_call.1} parent=1 // pred_check
      _
    $region67: #{tpu_custom_call.1} parent=1 // pred_check_branch
      %155 = sbr.rel (0) target = $region69
    $region68: #{tpu_custom_call.1} parent=1 // pred_region
      %s157 = ssub.s32 16, 16
      %158 = vsyncadd [#allocation13], %s157
      %s160 = sshll.u32 [#allocation12], 4
      %s161 = int_to_ptr.vmem [resolvable:$true] %s160
      %163 = dma.vmem_to_hbm [thread:$0]  %s161, 16, %s14, [#allocation13]
    $region69: #{tpu_custom_call.1} parent=1 // pred_fallthru
      _
    // Predicated region
    $region70: #{tpu_custom_call.1} parent=1 // pred_check
      _
    $region71: #{tpu_custom_call.1} parent=1 // pred_check_branch
      %165 = sbr.rel (0) target = $region73
    $region72: #{tpu_custom_call.1} parent=1 // pred_region
      %166 = dma.done [#allocation4], 16
    $region73: #{tpu_custom_call.1} parent=1 // pred_fallthru
      _
    // Predicated region
    $region74: #{tpu_custom_call.1} parent=1 // pred_check
      _
    $region75: #{tpu_custom_call.1} parent=1 // pred_check_branch
      %168 = sbr.rel (0) target = $region77
    $region76: #{tpu_custom_call.1} parent=1 // pred_region
      %169 = dma.done [#allocation10], 16
    $region77: #{tpu_custom_call.1} parent=1 // pred_fallthru
      _
    // Predicated region
    $region78: #{tpu_custom_call.1} parent=1 // pred_check
      _
    $region79: #{tpu_custom_call.1} parent=1 // pred_check_branch
      %171 = sbr.rel (0) target = $region81
    $region80: #{tpu_custom_call.1} parent=1 // pred_region
      %172 = dma.done [#allocation10], 16
    $region81: #{tpu_custom_call.1} parent=1 // pred_fallthru
      _
    // Predicated region
    $region82: #{tpu_custom_call.1} parent=1 // pred_check
      _
    $region83: #{tpu_custom_call.1} parent=1 // pred_check_branch
      %174 = sbr.rel (0) target = $region85
    $region84: #{tpu_custom_call.1} parent=1 // pred_region
      %175 = dma.done [#allocation13], 16
    $region85: #{tpu_custom_call.1} parent=1 // pred_fallthru
      _
    %176 = vsyncpa [#allocation4], 1
    %177 = vsyncpa [#allocation10], 1
    %178 = vsyncpa [#allocation13], 1
    %179 = vsyncpa [#allocation5], 1
    %180 = vsyncpa [#allocation7], 1

</llo_original>
